<compile_context>
chip_gen: v5e
topology: v5e:2x2
jax: 0.10.0
libtpu: 0.0.40
codegen_flags: <defaults>
</compile_context>

<pallas_src>
import functools

import jax
import jax.numpy as jnp
from jax import lax
from jax.experimental import pallas as pl
from jax.experimental.pallas import tpu as pltpu


def _round_up(x, m):
    return ((x + m - 1) // m) * m


def _pad2d(x, rows, cols, fill=0.0):
    r, c = x.shape
    return jnp.pad(x, ((0, rows - r), (0, cols - c)), constant_values=fill)


# --------------------------------------------------------------------------
# Kernel body shared by the "labels" and "explicit mask" variants.
# Grid = (row_blocks [parallel], col_blocks [arbitrary/reduction]).
# Scratch (per row block, re-initialized at ci == 0):
#   m_sc [TM,1] running max of scaled logits
#   l_sc [TM,1] running sum of exp(logit - m) over non-self, valid columns
#   p_sc [TM,1] running sum of pos_weight * scaled logit
#   n_sc [TM,1] running sum of pos_weight
# --------------------------------------------------------------------------
def _supcon_body(pos_w_fn, f_r_ref, f_c_ref, out_ref, m_sc, l_sc, p_sc, n_sc,
                 *, inv_temperature, scale, n_valid):
    ri = pl.program_id(0)
    ci = pl.program_id(1)
    tm = f_r_ref.shape[0]
    tk = f_c_ref.shape[0]

    @pl.when(ci == 0)
    def _():
        m_sc[...] = jnp.full_like(m_sc, -jnp.inf)
        l_sc[...] = jnp.zeros_like(l_sc)
        p_sc[...] = jnp.zeros_like(p_sc)
        n_sc[...] = jnp.zeros_like(n_sc)

    # anchor . contrast / temperature   -- MXU, contraction on last dims of
    # both operands (no transpose materialization), f32 accumulation.
    adc = lax.dot_general(
        f_r_ref[...], f_c_ref[...],
        (((1,), (1,)), ((), ())),
        preferred_element_type=jnp.float32) * inv_temperature        # (tm, tk)

    # Exclude self-contrast and padded columns.
    row_ids = ri * tm + lax.broadcasted_iota(jnp.int32, (tm, tk), 0)
    col_ids = ci * tk + lax.broadcasted_iota(jnp.int32, (tm, tk), 1)
    keep = jnp.logical_and(row_ids != col_ids, col_ids < n_valid)     # bool

    pos_w = pos_w_fn(keep)                                            # f32 (tm, tk)

    # Online log-sum-exp update. The max choice cancels exactly in
    # m + log(l), so including padded (zero) columns in the max is safe.
    m_new = jnp.maximum(m_sc[...], jnp.max(adc, axis=1, keepdims=True))
    e = jnp.where(keep, jnp.exp(adc - m_new), 0.0)
    l_sc[...] = jnp.exp(m_sc[...] - m_new) * l_sc[...] + jnp.sum(
        e, axis=1, keepdims=True)
    p_sc[...] = p_sc[...] + jnp.sum(pos_w * adc, axis=1, keepdims=True)
    n_sc[...] = n_sc[...] + jnp.sum(pos_w, axis=1, keepdims=True)
    m_sc[...] = m_new

    @pl.when(ci == pl.num_programs(1) - 1)
    def _():
        # Finalize: O(tm) work per row block -- negligible vs. the tile math.
        lse = m_sc[...] + jnp.log(l_sc[...])
        # NOTE: n_sc == 0 (anchor with no positives) -> NaN, same as PyTorch.
        mean_log_prob_pos = p_sc[...] / n_sc[...] - lse
        out_ref[...] = (-scale) * mean_log_prob_pos


def _supcon_kernel_labels(rl_ref, cl_ref, f_r_ref, f_c_ref, out_ref,
                          m_sc, l_sc, p_sc, n_sc,
                          *, inv_temperature, scale, n_valid):
    """Positive mask computed in-kernel from per-position labels."""
    def pos_w_fn(keep):
        same = rl_ref[...] == cl_ref[...]            # (tm,1)==(1,tk) -> (tm,tk)
        return jnp.where(jnp.logical_and(same, keep), 1.0, 0.0)

    _supcon_body(pos_w_fn, f_r_ref, f_c_ref, out_ref, m_sc, l_sc, p_sc, n_sc,
                 inv_temperature=inv_temperature, scale=scale, n_valid=n_valid)


def _supcon_kernel_mask(mask_ref, f_r_ref, f_c_ref, out_ref,
                        m_sc, l_sc, p_sc, n_sc,
                        *, inv_temperature, scale, n_valid):
    """Explicit (possibly asymmetric / weighted) mask, streamed per tile."""
    def pos_w_fn(keep):
        return mask_ref[...] * keep.astype(jnp.float32)

    _supcon_body(pos_w_fn, f_r_ref, f_c_ref, out_ref, m_sc, l_sc, p_sc, n_sc,
                 inv_temperature=inv_temperature, scale=scale, n_valid=n_valid)


# --------------------------------------------------------------------------
# Wrapper
# --------------------------------------------------------------------------
def supcon_loss(features, labels=None, mask=None,
                temperature=0.07, contrast_mode="all", base_temperature=0.07,
                compute_dtype=jnp.float32, block_rows=None, block_cols=None):
    """JAX/Pallas port of SupConLoss.forward.

    features: [bsz, n_views, ...] (trailing dims flattened to the feature dim)
    labels:   optional [bsz] int labels
    mask:     optional [bsz, bsz] float mask (mutually exclusive with labels)
    compute_dtype: dtype of the matmul operands (jnp.bfloat16 halves feature
                   DMA and doubles MXU throughput on v6e/v7x; accumulation and
                   all exp/log math stay in f32).
    """
    features = jnp.asarray(features)
    if features.ndim < 3:
        raise ValueError("`features` needs to be [bsz, n_views, ...]")
    if features.ndim > 3:
        features = features.reshape(features.shape[0], features.shape[1], -1)
    bsz, n_views, dim = features.shape

    if labels is not None and mask is not None:
        raise ValueError("Cannot define both `labels` and `mask`")

    contrast_count = n_views
    # contrast_feature = cat(unbind(features, 1), 0): row index = v*bsz + b
    contrast_feature = jnp.transpose(features, (1, 0, 2)).reshape(
        n_views * bsz, dim)

    if contrast_mode == "one":
        anchor_feature = features[:, 0]
        anchor_count = 1
    elif contrast_mode == "all":
        anchor_feature = contrast_feature
        anchor_count = contrast_count
    else:
        raise ValueError("Unknown mode: {}".format(contrast_mode))

    M = anchor_count * bsz      # anchor rows
    N = contrast_count * bsz    # contrast columns

    # ---- tile geometry (8,128-aligned; 256-ish tiles keep the MXU fed while
    # staying well inside v7x's smaller VMEM) ----
    TM = block_rows if block_rows is not None else min(256, _round_up(M, 8))
    TK = block_cols if block_cols is not None else min(256, _round_up(N, 128))
    M_pad = _round_up(M, TM)
    N_pad = _round_up(N, TK)
    D_pad = _round_up(dim, 128)
    # TODO(synk): for very large feature dims, add a third (contraction) grid
    # axis instead of keeping the full D in each feature block.

    f_rows = _pad2d(anchor_feature.astype(compute_dtype), M_pad, D_pad)
    f_cols = _pad2d(contrast_feature.astype(compute_dtype), N_pad, D_pad)

    grid = (M_pad // TM, N_pad // TK)
    out_shape = jax.ShapeDtypeStruct((M_pad, 1), jnp.float32)
    scratch = [pltpu.VMEM((TM, 1), jnp.float32)] * 4

    feat_row_spec = pl.BlockSpec((TM, D_pad), lambda ri, ci: (ri, 0))
    feat_col_spec = pl.BlockSpec((TK, D_pad), lambda ri, ci: (ci, 0))
    out_spec = pl.BlockSpec((TM, 1), lambda ri, ci: (ri, 0))

    static = dict(inv_temperature=float(1.0 / temperature),
                  scale=float(temperature / base_temperature),
                  n_valid=int(N))
    cparams = pltpu.CompilerParams(
        dimension_semantics=("parallel", "arbitrary"),
        vmem_limit_bytes=32 * 1024 * 1024)

    if mask is not None:
        # Explicit mask path: the [bsz, bsz] mask can be arbitrary/asymmetric,
        # so it cannot be reduced to per-position labels; stream the tiled
        # [M, N] mask per block instead (still fully pipelined).
        base_mask = jnp.asarray(mask, jnp.float32)
        tiled_mask = _pad2d(jnp.tile(base_mask, (anchor_count, contrast_count)),
                            M_pad, N_pad)
        kernel = functools.partial(_supcon_kernel_mask, **static)
        out = pl.pallas_call(
            kernel,
            out_shape=out_shape,
            grid_spec=pltpu.PrefetchScalarGridSpec(
                num_scalar_prefetch=0, grid=grid,
                in_specs=[pl.BlockSpec((TM, TK), lambda ri, ci: (ri, ci)),
                          feat_row_spec, feat_col_spec],
                out_specs=out_spec,
                scratch_shapes=scratch),
            compiler_params=cparams,
        )(tiled_mask, f_rows, f_cols)
    else:
        if labels is not None:
            labels = jnp.asarray(labels).reshape(-1).astype(jnp.int32)
            if labels.shape[0] != bsz:
                raise ValueError("Num of labels does not match num of features")
            ids = labels
        else:
            # SimCLR: mask = eye(bsz)  <=>  label == sample index.
            ids = jnp.arange(bsz, dtype=jnp.int32)

        col_ids_arr = jnp.tile(ids, contrast_count)      # [N]
        row_ids_arr = jnp.tile(ids, anchor_count)        # [M]
        row_lab = jnp.pad(row_ids_arr, (0, M_pad - M),
                          constant_values=-1).reshape(M_pad, 1)
        col_lab = jnp.pad(col_ids_arr, (0, N_pad - N),
                          constant_values=-1).reshape(1, N_pad)

        kernel = functools.partial(_supcon_kernel_labels, **static)
        out = pl.pallas_call(
            kernel,
            out_shape=out_shape,
            grid_spec=pltpu.PrefetchScalarGridSpec(
                num_scalar_prefetch=0, grid=grid,
                in_specs=[pl.BlockSpec((TM, 1), lambda ri, ci: (ri, 0)),
                          pl.BlockSpec((1, TK), lambda ri, ci: (0, ci)),
                          feat_row_spec, feat_col_spec],
                out_specs=out_spec,
                scratch_shapes=scratch),
            compiler_params=cparams,
        )(row_lab, col_lab, f_rows, f_cols)

    # loss.view(anchor_count, batch_size).mean() == mean over all M anchors.
    return jnp.mean(out[:M, 0])


# --------------------------------------------------------------------------
# Pure-JAX reference (mirrors the PyTorch code) for sanity checks.
# --------------------------------------------------------------------------
def _supcon_loss_ref(features, labels=None, mask=None,
                     temperature=0.07, contrast_mode="all",
                     base_temperature=0.07):
    bsz, n_views, dim = features.shape
    if labels is None and mask is None:
        base_mask = jnp.eye(bsz, dtype=jnp.float32)
    elif labels is not None:
        lab = labels.reshape(-1, 1)
        base_mask = (lab == lab.T).astype(jnp.float32)
    else:
        base_mask = jnp.asarray(mask, jnp.float32)

    cf = jnp.transpose(features, (1, 0, 2)).reshape(n_views * bsz, dim)
    if contrast_mode == "one":
        af = features[:, 0]
        anchor_count = 1
    else:
        af = cf
        anchor_count = n_views

    adc = (af @ cf.T) / temperature
    logits = adc - jnp.max(adc, axis=1, keepdims=True)
    M = anchor_count * bsz
    N = n_views * bsz
    m_rep = jnp.tile(base_mask, (anchor_count, n_views))
    logits_mask = jnp.ones((M, N), jnp.float32).at[
        jnp.arange(M), jnp.arange(M)].set(0.0)
    m_rep = m_rep * logits_mask
    exp_logits = jnp.exp(logits) * logits_mask
    log_prob = logits - jnp.log(exp_logits.sum(1, keepdims=True))
    mlpp = (m_rep * log_prob).sum(1) / m_rep.sum(1)
    return jnp.mean(-(temperature / base_temperature) * mlpp)


if __name__ == "__main__":
    key = jax.random.PRNGKey(0)
    k_feat, k_lab = jax.random.split(key)

    bsz, n_views, dim = 8, 2, 32
    feats = jax.random.normal(k_feat, (bsz, n_views, dim), dtype=jnp.float32)
    feats = feats / jnp.linalg.norm(feats, axis=-1, keepdims=True)
    labels = jax.random.randint(k_lab, (bsz,), 0, 3)

    # 1) supervised, contrast_mode='all' (labels -> in-kernel mask)
    loss = jax.block_until_ready(supcon_loss(feats, labels=labels))
    ref = _supcon_loss_ref(feats, labels=labels)
    assert jnp.isfinite(loss), "loss is not finite"
    assert jnp.allclose(loss, ref, rtol=1e-4, atol=1e-4), (loss, ref)

    # 2) SimCLR (no labels, no mask)
    loss_u = jax.block_until_ready(supcon_loss(feats))
    ref_u = _supcon_loss_ref(feats)
    assert jnp.allclose(loss_u, ref_u, rtol=1e-4, atol=1e-4), (loss_u, ref_u)

    # 3) explicit asymmetric mask
    eye = jnp.eye(bsz, dtype=jnp.float32)
    asym_mask = jnp.clip(eye + jnp.roll(eye, 1, axis=1), 0.0, 1.0)
    loss_m = jax.block_until_ready(supcon_loss(feats, mask=asym_mask))
    ref_m = _supcon_loss_ref(feats, mask=asym_mask)
    assert jnp.allclose(loss_m, ref_m, rtol=1e-4, atol=1e-4), (loss_m, ref_m)

    # 4) contrast_mode='one'
    loss_o = jax.block_until_ready(
        supcon_loss(feats, labels=labels, contrast_mode="one"))
    ref_o = _supcon_loss_ref(feats, labels=labels, contrast_mode="one")
    assert jnp.allclose(loss_o, ref_o, rtol=1e-4, atol=1e-4), (loss_o, ref_o)

    print("KERNEL_OK")
</pallas_src>

<mosaic_0001>
module attributes {stable_mosaic.version = 11 : i64} {
  func.func @_supcon_kernel_labels(%arg0: i32, %arg1: i32, %arg2: memref<16x1xi32, #tpu.memory_space<vmem>>, %arg3: memref<1x128xi32, #tpu.memory_space<vmem>>, %arg4: memref<16x128xf32, #tpu.memory_space<vmem>>, %arg5: memref<128x128xf32, #tpu.memory_space<vmem>>, %arg6: memref<16x1xf32, #tpu.memory_space<vmem>>, %arg7: memref<16x1xf32, #tpu.memory_space<vmem>>, %arg8: memref<16x1xf32, #tpu.memory_space<vmem>>, %arg9: memref<16x1xf32, #tpu.memory_space<vmem>>, %arg10: memref<16x1xf32, #tpu.memory_space<vmem>>) attributes {dimension_semantics = [#tpu.dimension_semantics<parallel>, #tpu.dimension_semantics<arbitrary>], iteration_bounds = array<i64: 1, 1>, scalar_prefetch = 0 : i64, scratch_operands = 4 : i64, tpu.core_type = #tpu.core_type<tc>, window_params = [{transform_indices = @transform_0, window_bounds = array<i64: 16, 1>}, {transform_indices = @transform_1, window_bounds = array<i64: 1, 128>}, {transform_indices = @transform_2, window_bounds = array<i64: 16, 128>}, {transform_indices = @transform_3, window_bounds = array<i64: 128, 128>}, {transform_indices = @transform_4, window_bounds = array<i64: 16, 1>}]} {
    %c0_i32 = arith.constant 0 : i32
    %0 = arith.cmpi eq, %arg1, %c0_i32 : i32
    %1 = arith.extui %0 : i1 to i32
    %c0_i32_0 = arith.constant 0 : i32
    %2 = arith.cmpi ne, %1, %c0_i32_0 : i32
    scf.if %2 {
      %cst_37 = arith.constant 0xFF800000 : f32
      %62 = vector.broadcast %cst_37 : f32 to vector<16x1xf32>
      %c0_38 = arith.constant 0 : index
      %c0_39 = arith.constant 0 : index
      %63 = vector.load %arg7[%c0_38, %c0_39] : memref<16x1xf32, #tpu.memory_space<vmem>>, vector<16x1xf32>
      tpu.vector_store %arg7[%c0_38, %c0_39], %62 {strides = array<i32>} : memref<16x1xf32, #tpu.memory_space<vmem>>, vector<16x1xf32>,
      %cst_40 = arith.constant 0.000000e+00 : f32
      %64 = vector.broadcast %cst_40 : f32 to vector<16x1xf32>
      %c0_41 = arith.constant 0 : index
      %c0_42 = arith.constant 0 : index
      %65 = vector.load %arg8[%c0_41, %c0_42] : memref<16x1xf32, #tpu.memory_space<vmem>>, vector<16x1xf32>
      tpu.vector_store %arg8[%c0_41, %c0_42], %64 {strides = array<i32>} : memref<16x1xf32, #tpu.memory_space<vmem>>, vector<16x1xf32>,
      %cst_43 = arith.constant 0.000000e+00 : f32
      %66 = vector.broadcast %cst_43 : f32 to vector<16x1xf32>
      %c0_44 = arith.constant 0 : index
      %c0_45 = arith.constant 0 : index
      %67 = vector.load %arg9[%c0_44, %c0_45] : memref<16x1xf32, #tpu.memory_space<vmem>>, vector<16x1xf32>
      tpu.vector_store %arg9[%c0_44, %c0_45], %66 {strides = array<i32>} : memref<16x1xf32, #tpu.memory_space<vmem>>, vector<16x1xf32>,
      %cst_46 = arith.constant 0.000000e+00 : f32
      %68 = vector.broadcast %cst_46 : f32 to vector<16x1xf32>
      %c0_47 = arith.constant 0 : index
      %c0_48 = arith.constant 0 : index
      %69 = vector.load %arg10[%c0_47, %c0_48] : memref<16x1xf32, #tpu.memory_space<vmem>>, vector<16x1xf32>
      tpu.vector_store %arg10[%c0_47, %c0_48], %68 {strides = array<i32>} : memref<16x1xf32, #tpu.memory_space<vmem>>, vector<16x1xf32>,
    } else {
    }
    %c0 = arith.constant 0 : index
    %c0_1 = arith.constant 0 : index
    %3 = vector.load %arg4[%c0, %c0_1] : memref<16x128xf32, #tpu.memory_space<vmem>>, vector<16x128xf32>
    %c0_2 = arith.constant 0 : index
    %c0_3 = arith.constant 0 : index
    %4 = vector.load %arg5[%c0_2, %c0_3] : memref<128x128xf32, #tpu.memory_space<vmem>>, vector<128x128xf32>
    %cst = arith.constant dense<0.000000e+00> : vector<16x128xf32>
    %5 = tpu.matmul %3, %4, %cst {dimension_numbers = #tpu.dot_dimension_numbers<[1], [1], [0], [0], [0, 0, 1, 0], [], []>} : vector<16x128xf32>, vector<128x128xf32>, vector<16x128xf32> -> vector<16x128xf32>
    %cst_4 = arith.constant 14.2857141 : f32
    %6 = vector.broadcast %cst_4 : f32 to vector<16x128xf32>
    %7 = arith.mulf %5, %6 : vector<16x128xf32>
    %c16_i32 = arith.constant 16 : i32
    %8 = arith.muli %arg0, %c16_i32 : i32
    %9 = tpu.iota {dimensions = array<i32: 0>} : vector<16x128xi32>
    %10 = vector.broadcast %8 : i32 to vector<16x128xi32>
    %11 = arith.addi %10, %9 : vector<16x128xi32>
    %c128_i32 = arith.constant 128 : i32
    %12 = arith.muli %arg1, %c128_i32 : i32
    %13 = tpu.iota {dimensions = array<i32: 1>} : vector<16x128xi32>
    %14 = vector.broadcast %12 : i32 to vector<16x128xi32>
    %15 = arith.addi %14, %13 : vector<16x128xi32>
    %16 = arith.cmpi ne, %11, %15 : vector<16x128xi32>
    %c16_i32_5 = arith.constant 16 : i32
    %17 = vector.broadcast %c16_i32_5 : i32 to vector<16x128xi32>
    %18 = arith.cmpi slt, %15, %17 : vector<16x128xi32>
    %19 = arith.andi %16, %18 : vector<16x128xi1>
    %c0_6 = arith.constant 0 : index
    %c0_7 = arith.constant 0 : index
    %20 = vector.load %arg2[%c0_6, %c0_7] : memref<16x1xi32, #tpu.memory_space<vmem>>, vector<16x1xi32>
    %c0_8 = arith.constant 0 : index
    %c0_9 = arith.constant 0 : index
    %21 = vector.load %arg3[%c0_8, %c0_9] : memref<1x128xi32, #tpu.memory_space<vmem>>, vector<1x128xi32>
    %22 = vector.broadcast %20 : vector<16x1xi32> to vector<16x128xi32>
    %23 = vector.broadcast %21 : vector<1x128xi32> to vector<16x128xi32>
    %24 = arith.cmpi eq, %22, %23 : vector<16x128xi32>
    %25 = arith.andi %24, %19 : vector<16x128xi1>
    %cst_10 = arith.constant 1.000000e+00 : f32
    %cst_11 = arith.constant 0.000000e+00 : f32
    %26 = vector.broadcast %cst_10 : f32 to vector<16x128xf32>
    %27 = vector.broadcast %cst_11 : f32 to vector<16x128xf32>
    %28 = arith.select %25, %26, %27 : vector<16x128xi1>, vector<16x128xf32>
    %c0_12 = arith.constant 0 : index
    %c0_13 = arith.constant 0 : index
    %29 = vector.load %arg7[%c0_12, %c0_13] : memref<16x1xf32, #tpu.memory_space<vmem>>, vector<16x1xf32>
    %cst_14 = arith.constant dense<0xFF800000> : vector<16xf32>
    %30 = vector.multi_reduction <maximumf>, %7, %cst_14 [1] : vector<16x128xf32> to vector<16xf32>
    %31 = vector.shape_cast %30 : vector<16xf32> to vector<16x1xf32>
    %32 = arith.maximumf %29, %31 : vector<16x1xf32>
    %33 = vector.broadcast %32 : vector<16x1xf32> to vector<16x128xf32>
    %34 = arith.subf %7, %33 : vector<16x128xf32>
    %35 = math.exp %34 : vector<16x128xf32>
    %cst_15 = arith.constant 0.000000e+00 : f32
    %36 = vector.broadcast %cst_15 : f32 to vector<16x128xf32>
    %37 = arith.select %19, %35, %36 : vector<16x128xi1>, vector<16x128xf32>
    %c0_16 = arith.constant 0 : index
    %c0_17 = arith.constant 0 : index
    %38 = vector.load %arg7[%c0_16, %c0_17] : memref<16x1xf32, #tpu.memory_space<vmem>>, vector<16x1xf32>
    %39 = arith.subf %38, %32 : vector<16x1xf32>
    %40 = math.exp %39 : vector<16x1xf32>
    %c0_18 = arith.constant 0 : index
    %c0_19 = arith.constant 0 : index
    %41 = vector.load %arg8[%c0_18, %c0_19] : memref<16x1xf32, #tpu.memory_space<vmem>>, vector<16x1xf32>
    %42 = arith.mulf %40, %41 : vector<16x1xf32>
    %cst_20 = arith.constant dense<0.000000e+00> : vector<16xf32>
    %43 = vector.multi_reduction <add>, %37, %cst_20 [1] : vector<16x128xf32> to vector<16xf32>
    %44 = vector.shape_cast %43 : vector<16xf32> to vector<16x1xf32>
    %45 = arith.addf %42, %44 : vector<16x1xf32>
    %c0_21 = arith.constant 0 : index
    %c0_22 = arith.constant 0 : index
    %46 = vector.load %arg8[%c0_21, %c0_22] : memref<16x1xf32, #tpu.memory_space<vmem>>, vector<16x1xf32>
    tpu.vector_store %arg8[%c0_21, %c0_22], %45 {strides = array<i32>} : memref<16x1xf32, #tpu.memory_space<vmem>>, vector<16x1xf32>,
    %c0_23 = arith.constant 0 : index
    %c0_24 = arith.constant 0 : index
    %47 = vector.load %arg9[%c0_23, %c0_24] : memref<16x1xf32, #tpu.memory_space<vmem>>, vector<16x1xf32>
    %48 = arith.mulf %28, %7 : vector<16x128xf32>
    %cst_25 = arith.constant dense<0.000000e+00> : vector<16xf32>
    %49 = vector.multi_reduction <add>, %48, %cst_25 [1] : vector<16x128xf32> to vector<16xf32>
    %50 = vector.shape_cast %49 : vector<16xf32> to vector<16x1xf32>
    %51 = arith.addf %47, %50 : vector<16x1xf32>
    %c0_26 = arith.constant 0 : index
    %c0_27 = arith.constant 0 : index
    %52 = vector.load %arg9[%c0_26, %c0_27] : memref<16x1xf32, #tpu.memory_space<vmem>>, vector<16x1xf32>
    tpu.vector_store %arg9[%c0_26, %c0_27], %51 {strides = array<i32>} : memref<16x1xf32, #tpu.memory_space<vmem>>, vector<16x1xf32>,
    %c0_28 = arith.constant 0 : index
    %c0_29 = arith.constant 0 : index
    %53 = vector.load %arg10[%c0_28, %c0_29] : memref<16x1xf32, #tpu.memory_space<vmem>>, vector<16x1xf32>
    %cst_30 = arith.constant dense<0.000000e+00> : vector<16xf32>
    %54 = vector.multi_reduction <add>, %28, %cst_30 [1] : vector<16x128xf32> to vector<16xf32>
    %55 = vector.shape_cast %54 : vector<16xf32> to vector<16x1xf32>
    %56 = arith.addf %53, %55 : vector<16x1xf32>
    %c0_31 = arith.constant 0 : index
    %c0_32 = arith.constant 0 : index
    %57 = vector.load %arg10[%c0_31, %c0_32] : memref<16x1xf32, #tpu.memory_space<vmem>>, vector<16x1xf32>
    tpu.vector_store %arg10[%c0_31, %c0_32], %56 {strides = array<i32>} : memref<16x1xf32, #tpu.memory_space<vmem>>, vector<16x1xf32>,
    %c0_33 = arith.constant 0 : index
    %c0_34 = arith.constant 0 : index
    %58 = vector.load %arg7[%c0_33, %c0_34] : memref<16x1xf32, #tpu.memory_space<vmem>>, vector<16x1xf32>
    tpu.vector_store %arg7[%c0_33, %c0_34], %32 {strides = array<i32>} : memref<16x1xf32, #tpu.memory_space<vmem>>, vector<16x1xf32>,
    %c0_i32_35 = arith.constant 0 : i32
    %59 = arith.cmpi eq, %arg1, %c0_i32_35 : i32
    %60 = arith.extui %59 : i1 to i32
    %c0_i32_36 = arith.constant 0 : i32
    %61 = arith.cmpi ne, %60, %c0_i32_36 : i32
    scf.if %61 {
      %c0_37 = arith.constant 0 : index
      %c0_38 = arith.constant 0 : index
      %62 = vector.load %arg7[%c0_37, %c0_38] : memref<16x1xf32, #tpu.memory_space<vmem>>, vector<16x1xf32>
      %c0_39 = arith.constant 0 : index
      %c0_40 = arith.constant 0 : index
      %63 = vector.load %arg8[%c0_39, %c0_40] : memref<16x1xf32, #tpu.memory_space<vmem>>, vector<16x1xf32>
      %64 = math.log %63 : vector<16x1xf32>
      %65 = arith.addf %62, %64 : vector<16x1xf32>
      %c0_41 = arith.constant 0 : index
      %c0_42 = arith.constant 0 : index
      %66 = vector.load %arg9[%c0_41, %c0_42] : memref<16x1xf32, #tpu.memory_space<vmem>>, vector<16x1xf32>
      %c0_43 = arith.constant 0 : index
      %c0_44 = arith.constant 0 : index
      %67 = vector.load %arg10[%c0_43, %c0_44] : memref<16x1xf32, #tpu.memory_space<vmem>>, vector<16x1xf32>
      %68 = arith.divf %66, %67 : vector<16x1xf32>
      %69 = arith.subf %68, %65 : vector<16x1xf32>
      %cst_45 = arith.constant -1.000000e+00 : f32
      %70 = vector.broadcast %cst_45 : f32 to vector<16x1xf32>
      %71 = arith.mulf %70, %69 : vector<16x1xf32>
      %c0_46 = arith.constant 0 : index
      %c0_47 = arith.constant 0 : index
      %72 = vector.load %arg6[%c0_46, %c0_47] : memref<16x1xf32, #tpu.memory_space<vmem>>, vector<16x1xf32>
      tpu.vector_store %arg6[%c0_46, %c0_47], %71 {strides = array<i32>} : memref<16x1xf32, #tpu.memory_space<vmem>>, vector<16x1xf32>,
    } else {
    }
    return
  }
  func.func @transform_0(%arg0: i32, %arg1: i32) -> (i32, i32) {
    %c0_i32 = arith.constant 0 : i32
    %c0_i32_0 = arith.constant 0 : i32
    return %arg0, %c0_i32 : i32, i32
  }
  func.func @transform_1(%arg0: i32, %arg1: i32) -> (i32, i32) {
    %c0_i32 = arith.constant 0 : i32
    %c0_i32_0 = arith.constant 0 : i32
    return %c0_i32, %arg1 : i32, i32
  }
  func.func @transform_2(%arg0: i32, %arg1: i32) -> (i32, i32) {
    %c0_i32 = arith.constant 0 : i32
    %c0_i32_0 = arith.constant 0 : i32
    return %arg0, %c0_i32 : i32, i32
  }
  func.func @transform_3(%arg0: i32, %arg1: i32) -> (i32, i32) {
    %c0_i32 = arith.constant 0 : i32
    %c0_i32_0 = arith.constant 0 : i32
    return %arg1, %c0_i32 : i32, i32
  }
  func.func @transform_4(%arg0: i32, %arg1: i32) -> (i32, i32) {
    %c0_i32 = arith.constant 0 : i32
    %c0_i32_0 = arith.constant 0 : i32
    return %arg0, %c0_i32 : i32, i32
  }
}

</mosaic_0001>

<llo_original>
// kernel: tpu_custom_call.1
$region0: #{tpu_custom_call.1}
  #allocation0 [shape = 'u32[]', space=smem, size = 0x4, offset = 0x4, fixed_abs, tag = 'smem constant byte address 0x4 - core index']
  #allocation1 [shape = 'u32[72,128]{1,0:T(1,128)}', space=vmem, size = 0x9000, scoped, tag = 'internal scratch']
  #allocation2 [shape = 'f32[16,1]{1,0:T(8,128)}', space=vmem, size = 0x2000, scoped, tag = 'scratch operand']
  #allocation3 [shape = 'f32[16,1]{1,0:T(8,128)}', space=vmem, size = 0x2000, scoped, tag = 'scratch operand']
  #allocation4 [shape = 'f32[16,1]{1,0:T(8,128)}', space=vmem, size = 0x2000, scoped, tag = 'scratch operand']
  #allocation5 [shape = 'f32[16,1]{1,0:T(8,128)}', space=vmem, size = 0x2000, scoped, tag = 'scratch operand']
  %s0 = inlined_call_operand.vmem [shape: s32[16,1], index: 0, kind: input, shape index: {}]
  %s1 = inlined_call_operand.vmem [shape: s32[1,128], index: 1, kind: input, shape index: {}]
  %s2 = inlined_call_operand.vmem [shape: f32[16,128], index: 2, kind: input, shape index: {}]
  %s3 = inlined_call_operand.hbm [shape: f32[128,128], index: 3, kind: input, shape index: {}]
  %s4 = inlined_call_operand.vmem [shape: f32[16,1], index: 4, kind: output, shape index: {}]
  %s5 = sld [smem:[#allocation0]]
  $region38: #{tpu_custom_call.1} parent=0
    _
  %s7 = ssub.s32 1, %s5
  %s8 = scalar_select 0, %s7, %s5
  $region1: #{tpu_custom_call.1} parent=0
    #allocation6 [shape = 'u8[65536]{0}', space=vmem, size = 0x10000, scoped, tag = 'input window, operand 3, single buffered']
    #allocation7 [shape = 's32[1]{0}', space=sflag, size = 0x4, scoped, tag = 'scoped memory for tpu_custom_call.1']
    %9 = vsyncpa [#allocation7], 0
    // Predicated region
    $region2: #{tpu_custom_call.1} parent=1 // pred_check
      _
    $region3: #{tpu_custom_call.1} parent=1 // pred_check_branch
      %11 = sbr.rel (0) target = $region5
    $region4: #{tpu_custom_call.1} parent=1 // pred_region
      _
    $region5: #{tpu_custom_call.1} parent=1 // pred_fallthru
      _
    // Predicated region
    $region6: #{tpu_custom_call.1} parent=1 // pred_check
      _
    $region7: #{tpu_custom_call.1} parent=1 // pred_check_branch
      %13 = sbr.rel (0) target = $region9
    $region8: #{tpu_custom_call.1} parent=1 // pred_region
      _
    $region9: #{tpu_custom_call.1} parent=1 // pred_fallthru
      _
    // Predicated region
    $region10: #{tpu_custom_call.1} parent=1 // pred_check
      _
    $region11: #{tpu_custom_call.1} parent=1 // pred_check_branch
      %15 = sbr.rel (0) target = $region13
    $region12: #{tpu_custom_call.1} parent=1 // pred_region
      _
    $region13: #{tpu_custom_call.1} parent=1 // pred_fallthru
      _
    // Predicated region
    $region14: #{tpu_custom_call.1} parent=1 // pred_check
      _
    $region15: #{tpu_custom_call.1} parent=1 // pred_check_branch
      %17 = sbr.rel (0) target = $region17
    $region16: #{tpu_custom_call.1} parent=1 // pred_region
      %19 = vsyncadd [#allocation7], 0
      %s20 = sshll.u32 %s3, 4
      %s21 = int_to_ptr.hbm [resolvable:$true] %s20
      %s22 = sshll.u32 [#allocation6], 4
      %s23 = int_to_ptr.vmem [resolvable:$true] %s22
      %28 = dma.hbm_to_vmem [thread:$0]  %s21, 2048, %s23, [#allocation7], 128, 128, 8
    $region17: #{tpu_custom_call.1} parent=1 // pred_fallthru
      _
    // Predicated region
    $region18: #{tpu_custom_call.1} parent=1 // pred_check
      _
    $region19: #{tpu_custom_call.1} parent=1 // pred_check_branch
      %30 = sbr.rel (0) target = $region21
    $region20: #{tpu_custom_call.1} parent=1 // pred_region
      %32 = dma.done [#allocation7], 2048
    $region21: #{tpu_custom_call.1} parent=1 // pred_fallthru
      _
    %p33 = scmp.eq.s32.totalorder 0, 0
    // Predicated region
    $region22: #{tpu_custom_call.1} parent=1 // pred_check
      %p34 = pneg %p33
    $region23: #{tpu_custom_call.1} parent=1 // pred_check_branch
      %36 = sbr.rel (%p34) target = $region25
    $region24: #{tpu_custom_call.1} parent=1 // pred_region
      %vm37 = vcmask 7168
      %38 = vst.msk [vmem:[#allocation2] sm:$0xff] %vm37, -inf
      %39 = vst.msk [vmem:[#allocation2 + $0x8] sm:$0xff] %vm37, -inf
      %40 = vst.msk [vmem:[#allocation3] sm:$0xff] %vm37, 0.0
      %41 = vst.msk [vmem:[#allocation3 + $0x8] sm:$0xff] %vm37, 0.0
      %42 = vst.msk [vmem:[#allocation4] sm:$0xff] %vm37, 0.0
      %43 = vst.msk [vmem:[#allocation4 + $0x8] sm:$0xff] %vm37, 0.0
      %44 = vst.msk [vmem:[#allocation5] sm:$0xff] %vm37, 0.0
      %45 = vst.msk [vmem:[#allocation5 + $0x8] sm:$0xff] %vm37, 0.0
    $region25: #{tpu_custom_call.1} parent=1 // pred_fallthru
      _
    %v46 = vld [vmem:[%s2] sm:$0xff]
    %v47 = vld [vmem:[%s2 + $0x8] sm:$0xff]
    %v48 = vld [vmem:[#allocation6] sm:$0xff]
    %v49 = vld [vmem:[#allocation6 + $0x8] sm:$0xff]
    %v50 = vld [vmem:[#allocation6 + $0x10] sm:$0xff]
    %v51 = vld [vmem:[#allocation6 + $0x18] sm:$0xff]
    %v52 = vld [vmem:[#allocation6 + $0x20] sm:$0xff]
    %v53 = vld [vmem:[#allocation6 + $0x28] sm:$0xff]
    %v54 = vld [vmem:[#allocation6 + $0x30] sm:$0xff]
    %v55 = vld [vmem:[#allocation6 + $0x38] sm:$0xff]
    %v56 = vld [vmem:[#allocation6 + $0x40] sm:$0xff]
    %v57 = vld [vmem:[#allocation6 + $0x48] sm:$0xff]
    %v58 = vld [vmem:[#allocation6 + $0x50] sm:$0xff]
    %v59 = vld [vmem:[#allocation6 + $0x58] sm:$0xff]
    %v60 = vld [vmem:[#allocation6 + $0x60] sm:$0xff]
    %v61 = vld [vmem:[#allocation6 + $0x68] sm:$0xff]
    %v62 = vld [vmem:[#allocation6 + $0x70] sm:$0xff]
    %v63 = vld [vmem:[#allocation6 + $0x78] sm:$0xff]
    %64 = vmatpush.xpose.msra.mxu0 %v63
    %65 = vmatpush.xpose.msra.mxu0 %v62
    %66 = vmatpush.xpose.msra.mxu0 %v61
    %67 = vmatpush.xpose.msra.mxu0 %v60
    %68 = vmatpush.xpose.msra.mxu0 %v59
    %69 = vmatpush.xpose.msra.mxu0 %v58
    %70 = vmatpush.xpose.msra.mxu0 %v57
    %71 = vmatpush.xpose.msra.mxu0 %v56
    %72 = vmatpush.xpose.msra.mxu0 %v55
    %73 = vmatpush.xpose.msra.mxu0 %v54
    %74 = vmatpush.xpose.msra.mxu0 %v53
    %75 = vmatpush.xpose.msra.mxu0 %v52
    %76 = vmatpush.xpose.msra.mxu0 %v51
    %77 = vmatpush.xpose.msra.mxu0 %v50
    %78 = vmatpush.xpose.msra.mxu0 %v49
    %79 = vmatpush.xpose.msra.mxu0 %v48
    %80 = vmatmul.f32.gmra.mxu0 %v46
    %v81 = vpop.f32.mrf.mxu0
    %v82 = vadd.f32 0.0, %v81
    %83 = vmatmul.f32.gmra.mxu0 %v47
    %v84 = vpop.f32.mrf.mxu0
    %v85 = vadd.f32 0.0, %v84
    %86 = vdwg.mxu0
    %v87 = vmul.f32 %v82, 14.285714
    %v88 = vmul.f32 %v85, 14.285714
    %s89 = smul.u32 0, 16
    %v90 = vlaneseq
    %v91 = vshrl.u32 %v90, 7
    %v92 = vadd.s32 %v91, 8
    %v93 = vstv %s89
    %v94 = vadd.s32 %v93, %v91
    %v95 = vadd.s32 %v93, %v92
    %s96 = smul.u32 0, 128
    %v97 = vlaneseq
    %v98 = vand.u32 %v97, 127
    %v99 = vstv %s96
    %v100 = vadd.s32 %v99, %v98
    %vm101 = vcmp.ne.s32.totalorder %v94, %v100
    %vm102 = vcmp.ne.s32.totalorder %v95, %v100
    %vm103 = vcmp.lt.s32.totalorder %v100, 16
    %vm104 = vmand %vm101, %vm103
    %vm105 = vmand %vm102, %vm103
    %v106 = vld [vmem:[%s0] sm:$0xff]
    %v107 = vld [vmem:[%s0 + $0x8] sm:$0xff]
    %v108 = vld [vmem:[%s1] sm:$0x1]
    %109 = vset.pattern.permute.xlu0 0
    %110 = vperm.xlu0 %109, %v106
    %v111 = vpop.permute.xlu0 %110
    %112 = vset.pattern.permute.xlu0 0
    %113 = vperm.xlu0 %112, %v107
    %v114 = vpop.permute.xlu0 %113
    %v115 = vperm.slane %v108, 0
    %vm116 = vcmp.eq.s32.totalorder %v111, %v115
    %vm117 = vcmp.eq.s32.totalorder %v114, %v115
    %vm118 = vmand %vm116, %vm104
    %vm119 = vmand %vm117, %vm105
    %v120 = vsel %vm118, 1.0, 0.0
    %v121 = vsel %vm119, 1.0, 0.0
    %v122 = vld [vmem:[#allocation2] sm:$0xff]
    %v123 = vld [vmem:[#allocation2 + $0x8] sm:$0xff]
    %124 = vmax.xlane.f32.xlu0 %v87
    %v125 = vpop.xlane.xlu0 %124
    %126 = vmax.xlane.f32.xlu0 %v88
    %v127 = vpop.xlane.xlu0 %126
    %v128 = vmax.f32 %v122, %v125
    %v129 = vmax.f32 %v123, %v127
    %131 = vset.pattern.permute.xlu0 0
    %132 = vperm.xlu0 %131, %v128
    %v133 = vpop.permute.xlu0 %132
    %136 = vset.pattern.permute.xlu0 0
    %137 = vperm.xlu0 %136, %v129
    %v138 = vpop.permute.xlu0 %137
    %v140 = vsub.f32 %v87, %v133
    %v141 = vsub.f32 %v88, %v138
    %v142 = vmul.f32 %v140, 1.442695
    %v143 = vpow.pop %v142
    %v144 = vmul.f32 %v141, 1.442695
    %v145 = vpow.pop %v144
    %v146 = vsel %vm104, %v143, 0.0
    %v147 = vsel %vm105, %v145, 0.0
    %v148 = vsub.f32 %v122, %v128
    %v149 = vsub.f32 %v123, %v129
    %v150 = vmul.f32 %v148, 1.442695
    %v151 = vpow.pop %v150
    %v152 = vmul.f32 %v149, 1.442695
    %v153 = vpow.pop %v152
    %v154 = vld [vmem:[#allocation3] sm:$0xff]
    %v155 = vld [vmem:[#allocation3 + $0x8] sm:$0xff]
    %v156 = vmul.f32 %v151, %v154
    %v157 = vmul.f32 %v153, %v155
    %158 = vadd.xlane.f32.xlu0 %v146
    %v159 = vpop.xlane.xlu0 %158
    %160 = vadd.xlane.f32.xlu0 %v147
    %v161 = vpop.xlane.xlu0 %160
    %v162 = vadd.f32 %v156, %v159
    %v163 = vadd.f32 %v157, %v161
    %vm164 = vcmask 7168
    %165 = vst.msk [vmem:[#allocation3] sm:$0xff] %vm164, %v162
    %166 = vst.msk [vmem:[#allocation3 + $0x8] sm:$0xff] %vm164, %v163
    %v167 = vld [vmem:[#allocation4] sm:$0xff]
    %v168 = vld [vmem:[#allocation4 + $0x8] sm:$0xff]
    %v169 = vmul.f32 %v120, %v87
    %v170 = vmul.f32 %v121, %v88
    %171 = vadd.xlane.f32.xlu0 %v169
    %v172 = vpop.xlane.xlu0 %171
    %173 = vadd.xlane.f32.xlu0 %v170
    %v174 = vpop.xlane.xlu0 %173
    %v175 = vadd.f32 %v167, %v172
    %v176 = vadd.f32 %v168, %v174
    %177 = vst.msk [vmem:[#allocation4] sm:$0xff] %vm164, %v175
    %178 = vst.msk [vmem:[#allocation4 + $0x8] sm:$0xff] %vm164, %v176
    %v179 = vld [vmem:[#allocation5] sm:$0xff]
    %v180 = vld [vmem:[#allocation5 + $0x8] sm:$0xff]
    %181 = vadd.xlane.f32.xlu0 %v120
    %v182 = vpop.xlane.xlu0 %181
    %183 = vadd.xlane.f32.xlu0 %v121
    %v184 = vpop.xlane.xlu0 %183
    %v185 = vadd.f32 %v179, %v182
    %v186 = vadd.f32 %v180, %v184
    %187 = vst.msk [vmem:[#allocation5] sm:$0xff] %vm164, %v185
    %188 = vst.msk [vmem:[#allocation5 + $0x8] sm:$0xff] %vm164, %v186
    %189 = vst.msk [vmem:[#allocation2] sm:$0xff] %vm164, %v128
    %190 = vst.msk [vmem:[#allocation2 + $0x8] sm:$0xff] %vm164, %v129
    // Predicated region
    $region26: #{tpu_custom_call.1} parent=1 // pred_check
      %p191 = pneg %p33
    $region27: #{tpu_custom_call.1} parent=1 // pred_check_branch
      %193 = sbr.rel (%p191) target = $region29
    $region28: #{tpu_custom_call.1} parent=1 // pred_region
      %v194 = vld [vmem:[#allocation2] sm:$0xff]
      %v195 = vld [vmem:[#allocation2 + $0x8] sm:$0xff]
      %v196 = vld [vmem:[#allocation3] sm:$0xff]
      %v197 = vld [vmem:[#allocation3 + $0x8] sm:$0xff]
      %v198 = vlog2.pop %v196
      %v199 = vmul.f32 %v198, 0.6931472
      %v200 = vlog2.pop %v197
      %v201 = vmul.f32 %v200, 0.6931472
      %v202 = vadd.f32 %v194, %v199
      %v203 = vadd.f32 %v195, %v201
      %v204 = vld [vmem:[#allocation4] sm:$0xff]
      %v205 = vld [vmem:[#allocation4 + $0x8] sm:$0xff]
      %v206 = vld [vmem:[#allocation5] sm:$0xff]
      %v207 = vld [vmem:[#allocation5 + $0x8] sm:$0xff]
      %v208 = vrcp.pop %v206
      %v209 = vmul.f32 %v206, %v208
      %v210 = vsub.f32 1.0, %v209
      %v211 = vmul.f32 %v208, %v210
      %v212 = vadd.f32 %v208, %v211
      %vm213 = vweird.f32 %v206
      %vm214 = vweird.f32 %v208
      %vm215 = vmor %vm213, %vm214
      %v216 = vsel %vm215, %v208, %v212
      %v217 = vand.u32 2147483647, %v206
      %vm218 = vcmp.eq.f32.partialorder %v217, 8.507059e+37
      %v219 = vand.u32 %v206, 2147483648
      %v220 = vor.u32 1.1754944e-38, %v219
      %v221 = vsel %vm218, %v220, %v216
      %v222 = vmul.f32 %v204, %v221
      %v223 = vrcp.pop %v207
      %v224 = vmul.f32 %v207, %v223
      %v225 = vsub.f32 1.0, %v224
      %v226 = vmul.f32 %v223, %v225
      %v227 = vadd.f32 %v223, %v226
      %vm228 = vweird.f32 %v207
      %vm229 = vweird.f32 %v223
      %vm230 = vmor %vm228, %vm229
      %v231 = vsel %vm230, %v223, %v227
      %v232 = vand.u32 2147483647, %v207
      %vm233 = vcmp.eq.f32.partialorder %v232, 8.507059e+37
      %v234 = vand.u32 %v207, 2147483648
      %v235 = vor.u32 1.1754944e-38, %v234
      %v236 = vsel %vm233, %v235, %v231
      %v237 = vmul.f32 %v205, %v236
      %v238 = vsub.f32 %v222, %v202
      %v239 = vsub.f32 %v237, %v203
      %v240 = vmul.f32 %v238, -1.0
      %v241 = vmul.f32 %v239, -1.0
      %242 = vst.msk [vmem:[%s4] sm:$0xff] %vm164, %v240
      %243 = vst.msk [vmem:[%s4 + $0x8] sm:$0xff] %vm164, %v241
    $region29: #{tpu_custom_call.1} parent=1 // pred_fallthru
      _
    // Predicated region
    $region30: #{tpu_custom_call.1} parent=1 // pred_check
      _
    $region31: #{tpu_custom_call.1} parent=1 // pred_check_branch
      %245 = sbr.rel (0) target = $region33
    $region32: #{tpu_custom_call.1} parent=1 // pred_region
      _
    $region33: #{tpu_custom_call.1} parent=1 // pred_fallthru
      _
    // Predicated region
    $region34: #{tpu_custom_call.1} parent=1 // pred_check
      _
    $region35: #{tpu_custom_call.1} parent=1 // pred_check_branch
      %247 = sbr.rel (0) target = $region37
    $region36: #{tpu_custom_call.1} parent=1 // pred_region
      _
    $region37: #{tpu_custom_call.1} parent=1 // pred_fallthru
      _
    %248 = vsyncpa [#allocation7], 1

</llo_original>
